<compile_context>
chip_gen: v7x
topology: tpu7x:2x2x1
jax: 0.10.0
libtpu: 0.0.40
codegen_flags: <defaults>
</compile_context>

<pallas_src>
import functools

import jax
import jax.numpy as jnp
from jax.experimental import pallas as pl
from jax.experimental.pallas import tpu as pltpu


def _pad128(n):
    return ((n + 127) // 128) * 128


# ----------------------------------------------------------------------------
# Fused kernel (one grid step per sample):
#   im2col (HW, KP) bf16  @  w1 (KP, C1P) bf16  -> f32 feats
#   + bias + ReLU -> global average pool -> head dot -> (1, NCLSP) logits
# ----------------------------------------------------------------------------
def _fused_conv_pool_head_kernel(x_ref, w1_ref, b1_ref, w2_ref, b2_ref, o_ref,
                                 *, inv_hw):
    # Single MXU dot for the whole 3x3 conv stem (K = 9*cin, zero-padded to 128).
    feats = jnp.dot(x_ref[...], w1_ref[...],
                    preferred_element_type=jnp.float32)          # (HW, C1P) f32
    feats = jnp.maximum(feats + b1_ref[...], 0.0)                # bias + ReLU
    # Global average pool: XLU column reduce (off the MXU/VALU critical path).
    pooled = jnp.sum(feats, axis=0, keepdims=True) * inv_hw      # (1, C1P) f32
    # Classifier head (tiny MXU dot), f32 accumulation + f32 bias.
    o_ref[...] = (jnp.dot(pooled.astype(jnp.bfloat16), w2_ref[...],
                          preferred_element_type=jnp.float32)
                  + b2_ref[...])


# ----------------------------------------------------------------------------
# One-time parameter preparation (outside the per-call path): pad to
# lane-dense (multiple-of-128) MXU layouts and cast weights to bf16.
# ----------------------------------------------------------------------------
def prepare_params(params):
    w1 = params["w1"]                                  # (3, 3, cin, c1)
    cin, c1 = w1.shape[2], w1.shape[3]
    ncls = params["w2"].shape[-1]
    k = 9 * cin
    kp, c1p, nclsp = _pad128(k), _pad128(c1), _pad128(ncls)

    w1p = jnp.zeros((kp, c1p), jnp.bfloat16)
    w1p = w1p.at[:k, :c1].set(w1.reshape(k, c1).astype(jnp.bfloat16))
    b1p = jnp.zeros((1, c1p), jnp.float32).at[0, :c1].set(params["b1"])
    w2p = jnp.zeros((c1p, nclsp), jnp.bfloat16)
    w2p = w2p.at[:c1, :ncls].set(params["w2"].astype(jnp.bfloat16))
    b2p = jnp.zeros((1, nclsp), jnp.float32).at[0, :ncls].set(params["b2"])
    return dict(w1p=w1p, b1p=b1p, w2p=w2p, b2p=b2p)


def _im2col_bf16(img_nchw):
    """NCHW float image -> (N, H*W, 9*cin) bf16 im2col of a 3x3 / pad=1 conv.

    Layout plumbing only (transpose + pad + shifted slices + concat); bf16 in
    HBM halves the input DMA vs. f32 and removes all in-kernel casts/relayouts.
    Tap ordering (di, dj, c) matches w1.reshape(9*cin, c1).
    """
    n, cin, h, w = img_nchw.shape
    x = jnp.transpose(img_nchw, (0, 2, 3, 1)).astype(jnp.bfloat16)
    xp = jnp.pad(x, ((0, 0), (1, 1), (1, 1), (0, 0)))
    taps = [xp[:, di:di + h, dj:dj + w, :] for di in range(3) for dj in range(3)]
    return jnp.concatenate(taps, axis=-1).reshape(n, h * w, 9 * cin)


def network_forward(img_nchw, padded_params, *, ncls):
    """Forward pass: NCHW float image -> (N, num_classes) logits."""
    n, cin, h, w = img_nchw.shape
    hw = h * w
    w1p, b1p = padded_params["w1p"], padded_params["b1p"]
    w2p, b2p = padded_params["w2p"], padded_params["b2p"]
    kp, c1p = w1p.shape
    nclsp = w2p.shape[1]

    # Lane-dense bf16 im2col of the activations, zero-padded on K to 128.
    x_cols = _im2col_bf16(img_nchw)
    x_cols = jnp.pad(x_cols, ((0, 0), (0, 0), (0, kp - 9 * cin)))

    kernel = functools.partial(_fused_conv_pool_head_kernel,
                               inv_hw=1.0 / float(hw))

    out = pl.pallas_call(
        kernel,
        out_shape=jax.ShapeDtypeStruct((n, 1, nclsp), jnp.float32),
        grid_spec=pltpu.PrefetchScalarGridSpec(
            num_scalar_prefetch=0,
            grid=(n,),                                   # one step per sample
            in_specs=[
                # Per-sample im2col slab (HW, KP); whole sample per step.
                pl.BlockSpec((pl.Squeezed(), hw, kp), lambda i: (i, 0, 0)),
                # Resident (constant block index) parameters.
                pl.BlockSpec((kp, c1p), lambda i: (0, 0)),
                pl.BlockSpec((1, c1p), lambda i: (0, 0)),
                pl.BlockSpec((c1p, nclsp), lambda i: (0, 0)),
                pl.BlockSpec((1, nclsp), lambda i: (0, 0)),
            ],
            out_specs=pl.BlockSpec((pl.Squeezed(), 1, nclsp),
                                   lambda i: (i, 0, 0)),
        ),
        compiler_params=pltpu.CompilerParams(
            dimension_semantics=("parallel",),           # samples across TCs
            vmem_limit_bytes=64 * 1024 * 1024,
        ),
    )(x_cols, w1p, b1p, w2p, b2p)

    return out.reshape(n, nclsp)[:, :ncls]


def _reference_forward(img_nchw, params):
    """Pure-JAX reference with identical math (bf16 MXU operands, f32 accum)."""
    n, cin, h, w = img_nchw.shape
    c1 = params["w1"].shape[-1]
    cols = _im2col_bf16(img_nchw)                              # (n, hw, 9*cin)
    w1 = params["w1"].reshape(9 * cin, c1).astype(jnp.bfloat16)
    feats = jnp.einsum("nmk,kd->nmd", cols, w1,
                       preferred_element_type=jnp.float32)     # f32
    feats = jnp.maximum(feats + params["b1"], 0.0)
    pooled = feats.mean(axis=1)                                # (n, c1) f32
    logits = jnp.dot(pooled.astype(jnp.bfloat16),
                     params["w2"].astype(jnp.bfloat16),
                     preferred_element_type=jnp.float32) + params["b2"]
    return logits


def init_params(key, cin=4, c1=32, ncls=3):
    k1, k2, k3, k4 = jax.random.split(key, 4)
    w1 = jax.random.normal(k1, (3, 3, cin, c1), jnp.float32) * 0.1
    b1 = jax.random.normal(k2, (c1,), jnp.float32) * 0.01
    w2 = jax.random.normal(k3, (c1, ncls), jnp.float32) * 0.1
    b2 = jax.random.normal(k4, (ncls,), jnp.float32) * 0.01
    return dict(w1=w1, b1=b1, w2=w2, b2=b2)


if __name__ == "__main__":
    key = jax.random.PRNGKey(0)
    k_img, k_par = jax.random.split(key)

    N, CIN, H, W = 2, 4, 16, 16      # small NCHW image batch
    C1, NCLS = 32, 3

    img = jax.random.normal(k_img, (N, CIN, H, W), jnp.float32)
    params = init_params(k_par, cin=CIN, c1=C1, ncls=NCLS)

    # Parameter padding / casting done ONCE, outside the per-call path.
    padded_params = prepare_params(params)

    fwd = jax.jit(functools.partial(network_forward, ncls=NCLS))
    out = jax.block_until_ready(fwd(img, padded_params))

    assert out.shape == (N, NCLS), out.shape
    ref = _reference_forward(img, params)
    assert jnp.allclose(out, ref, atol=2e-3, rtol=2e-3), (out, ref)

    print("KERNEL_OK")
</pallas_src>

<mosaic_0001>
module attributes {stable_mosaic.version = 11 : i64} {
  func.func @_fused_conv_pool_head_kernel(%arg0: i32, %arg1: memref<1x256x128xbf16, #tpu.memory_space<vmem>>, %arg2: memref<128x128xbf16, #tpu.memory_space<vmem>>, %arg3: memref<1x128xf32, #tpu.memory_space<vmem>>, %arg4: memref<128x128xbf16, #tpu.memory_space<vmem>>, %arg5: memref<1x128xf32, #tpu.memory_space<vmem>>, %arg6: memref<1x1x128xf32, #tpu.memory_space<vmem>>) attributes {dimension_semantics = [#tpu.dimension_semantics<parallel>], iteration_bounds = array<i64: 2>, scalar_prefetch = 0 : i64, scratch_operands = 0 : i64, tpu.core_type = #tpu.core_type<tc>, window_params = [{transform_indices = @transform_0, window_bounds = array<i64: 1, 256, 128>}, {pipeline_mode = #tpu.pipeline_mode<synchronous>, transform_indices = @transform_1, window_bounds = array<i64: 128, 128>}, {pipeline_mode = #tpu.pipeline_mode<synchronous>, transform_indices = @transform_2, window_bounds = array<i64: 1, 128>}, {pipeline_mode = #tpu.pipeline_mode<synchronous>, transform_indices = @transform_3, window_bounds = array<i64: 128, 128>}, {pipeline_mode = #tpu.pipeline_mode<synchronous>, transform_indices = @transform_4, window_bounds = array<i64: 1, 128>}, {transform_indices = @transform_5, window_bounds = array<i64: 1, 1, 128>}]} {
    %c0 = arith.constant 0 : index
    %c0_0 = arith.constant 0 : index
    %c0_1 = arith.constant 0 : index
    %0 = vector.load %arg1[%c0, %c0_0, %c0_1] : memref<1x256x128xbf16, #tpu.memory_space<vmem>>, vector<1x256x128xbf16>
    %1 = vector.shape_cast %0 : vector<1x256x128xbf16> to vector<256x128xbf16>
    %c0_2 = arith.constant 0 : index
    %c0_3 = arith.constant 0 : index
    %2 = vector.load %arg2[%c0_2, %c0_3] : memref<128x128xbf16, #tpu.memory_space<vmem>>, vector<128x128xbf16>
    %cst = arith.constant dense<0.000000e+00> : vector<256x128xf32>
    %3 = tpu.matmul %1, %2, %cst {dimension_numbers = #tpu.dot_dimension_numbers<[1], [0], [0], [1], [0, 0, 1, 1], [], []>} : vector<256x128xbf16>, vector<128x128xbf16>, vector<256x128xf32> -> vector<256x128xf32>
    %c0_4 = arith.constant 0 : index
    %c0_5 = arith.constant 0 : index
    %4 = vector.load %arg3[%c0_4, %c0_5] : memref<1x128xf32, #tpu.memory_space<vmem>>, vector<1x128xf32>
    %5 = vector.broadcast %4 : vector<1x128xf32> to vector<256x128xf32>
    %6 = arith.addf %3, %5 : vector<256x128xf32>
    %cst_6 = arith.constant 0.000000e+00 : f32
    %7 = vector.broadcast %cst_6 : f32 to vector<256x128xf32>
    %8 = arith.maximumf %6, %7 : vector<256x128xf32>
    %cst_7 = arith.constant dense<0.000000e+00> : vector<128xf32>
    %9 = vector.multi_reduction <add>, %8, %cst_7 [0] : vector<256x128xf32> to vector<128xf32>
    %10 = vector.shape_cast %9 : vector<128xf32> to vector<1x128xf32>
    %cst_8 = arith.constant 3.906250e-03 : f32
    %11 = vector.broadcast %cst_8 : f32 to vector<1x128xf32>
    %12 = arith.mulf %10, %11 : vector<1x128xf32>
    %13 = arith.truncf %12 : vector<1x128xf32> to vector<1x128xbf16>
    %c0_9 = arith.constant 0 : index
    %c0_10 = arith.constant 0 : index
    %14 = vector.load %arg4[%c0_9, %c0_10] : memref<128x128xbf16, #tpu.memory_space<vmem>>, vector<128x128xbf16>
    %cst_11 = arith.constant dense<0.000000e+00> : vector<1x128xf32>
    %15 = tpu.matmul %13, %14, %cst_11 {dimension_numbers = #tpu.dot_dimension_numbers<[1], [0], [0], [1], [0, 0, 1, 1], [], []>} : vector<1x128xbf16>, vector<128x128xbf16>, vector<1x128xf32> -> vector<1x128xf32>
    %c0_12 = arith.constant 0 : index
    %c0_13 = arith.constant 0 : index
    %16 = vector.load %arg5[%c0_12, %c0_13] : memref<1x128xf32, #tpu.memory_space<vmem>>, vector<1x128xf32>
    %17 = arith.addf %15, %16 : vector<1x128xf32>
    %c0_14 = arith.constant 0 : index
    %c0_15 = arith.constant 0 : index
    %c0_16 = arith.constant 0 : index
    %18 = vector.load %arg6[%c0_14, %c0_15, %c0_16] : memref<1x1x128xf32, #tpu.memory_space<vmem>>, vector<1x1x128xf32>
    %19 = vector.shape_cast %18 : vector<1x1x128xf32> to vector<1x128xf32>
    %20 = vector.shape_cast %17 : vector<1x128xf32> to vector<1x1x128xf32>
    tpu.vector_store %arg6[%c0_14, %c0_15, %c0_16], %20 {strides = array<i32>} : memref<1x1x128xf32, #tpu.memory_space<vmem>>, vector<1x1x128xf32>,
    return
  }
  func.func @transform_0(%arg0: i32) -> (i32, i32, i32) {
    %c0_i32 = arith.constant 0 : i32
    %c0_i32_0 = arith.constant 0 : i32
    %c0_i32_1 = arith.constant 0 : i32
    return %arg0, %c0_i32, %c0_i32_0 : i32, i32, i32
  }
  func.func @transform_1(%arg0: i32) -> (i32, i32) {
    %c0_i32 = arith.constant 0 : i32
    %c0_i32_0 = arith.constant 0 : i32
    %c0_i32_1 = arith.constant 0 : i32
    return %c0_i32, %c0_i32_0 : i32, i32
  }
  func.func @transform_2(%arg0: i32) -> (i32, i32) {
    %c0_i32 = arith.constant 0 : i32
    %c0_i32_0 = arith.constant 0 : i32
    %c0_i32_1 = arith.constant 0 : i32
    return %c0_i32, %c0_i32_0 : i32, i32
  }
  func.func @transform_3(%arg0: i32) -> (i32, i32) {
    %c0_i32 = arith.constant 0 : i32
    %c0_i32_0 = arith.constant 0 : i32
    %c0_i32_1 = arith.constant 0 : i32
    return %c0_i32, %c0_i32_0 : i32, i32
  }
  func.func @transform_4(%arg0: i32) -> (i32, i32) {
    %c0_i32 = arith.constant 0 : i32
    %c0_i32_0 = arith.constant 0 : i32
    %c0_i32_1 = arith.constant 0 : i32
    return %c0_i32, %c0_i32_0 : i32, i32
  }
  func.func @transform_5(%arg0: i32) -> (i32, i32, i32) {
    %c0_i32 = arith.constant 0 : i32
    %c0_i32_0 = arith.constant 0 : i32
    %c0_i32_1 = arith.constant 0 : i32
    return %arg0, %c0_i32, %c0_i32_0 : i32, i32, i32
  }
}

</mosaic_0001>

<llo_original>
// kernel: network_forward.1
$region0: #{network_forward.1}
  #allocation0 [shape = 'u32[]', space=smem, size = 0x4, offset = 0x4, fixed_abs, tag = 'smem constant byte address 0x4 - core index']
  #allocation1 [shape = 'u32[144,128]{1,0:T(1,128)}', space=vmem, size = 0x12000, scoped, tag = 'internal scratch']
  %s0 = inlined_call_operand.hbm [shape: bf16[2,256,128], index: 0, kind: input, shape index: {}]
  %s1 = inlined_call_operand.hbm [shape: bf16[128,128], index: 1, kind: input, shape index: {}]
  %s2 = inlined_call_operand.hbm [shape: f32[1,128], index: 2, kind: input, shape index: {}]
  %s3 = inlined_call_operand.hbm [shape: bf16[128,128], index: 3, kind: input, shape index: {}]
  %s4 = inlined_call_operand.hbm [shape: f32[1,128], index: 4, kind: input, shape index: {}]
  %s5 = inlined_call_operand.hbm [shape: f32[2,1,128], index: 5, kind: output, shape index: {}]
  %s6 = sld [smem:[#allocation0]]
  $region73: #{network_forward.1} parent=0
    _
  %s8 = ssub.s32 1, %s6
  %s9 = scalar_select 0, %s8, %s6
  $region1: #{network_forward.1} parent=0
    #allocation2 [shape = 'u8[131072]{0}', space=vmem, size = 0x20000, scoped, tag = 'input window, operand 0']
    #allocation3 [shape = 's32[2]{0}', space=sflag, size = 0x8, scoped, tag = 'scoped memory for network_forward.1']
    #allocation4 [shape = 's32[2]{0}', space=sflag, size = 0x8, scoped, tag = 'scoped memory for network_forward.1']
    #allocation5 [shape = 'u8[32768]{0}', space=vmem, size = 0x8000, scoped, tag = 'input window, operand 1, single buffered']
    #allocation6 [shape = 's32[1]{0}', space=sflag, size = 0x4, scoped, tag = 'scoped memory for network_forward.1']
    #allocation7 [shape = 'u8[512]{0}', space=vmem, size = 0x400, scoped, tag = 'input window, operand 2, single buffered']
    #allocation8 [shape = 'u8[32768]{0}', space=vmem, size = 0x8000, scoped, tag = 'input window, operand 3, single buffered']
    #allocation9 [shape = 's32[1]{0}', space=sflag, size = 0x4, scoped, tag = 'scoped memory for network_forward.1']
    #allocation10 [shape = 'u8[512]{0}', space=vmem, size = 0x400, scoped, tag = 'input window, operand 4, single buffered']
    #allocation11 [shape = 'u8[1024]{0}', space=vmem, size = 0x400, scoped, tag = 'output window, operand 0']
    %10 = vsyncpa [#allocation3], 0
    %s11 = scalar_lea.sflag [#allocation3], 1
    %12 = vsyncpa %s11, 0
    %13 = vsyncpa [#allocation6], 0
    %14 = vsyncpa [#allocation9], 0
    %15 = vsyncpa [#allocation4], 0
    %s16 = scalar_lea.sflag [#allocation4], 1
    %17 = vsyncpa %s16, 0
    loop: start=0, step=1, limit=4
    $region2: #{network_forward.1} parent=1 // loop_pre_header
      _
    $region3: #{network_forward.1} parent=1 // loop_header
      %s19 = sphi 0, %s23
      %p20 = scmp.ge.s32.totalorder %s19, 4
      %s29 = sphi 0, %s31
      %s32 = sphi 0, %s29
      %s33 = sphi 0, %s32
      %s49 = sphi 0, %s33
      %s53 = sphi 0, %s53
      %s55 = sphi 0, %s53
      %s56 = sphi 0, %s55
      %s70 = sphi 0, %s56
      %s74 = sphi 0, %s74
      %s76 = sphi 0, %s74
      %s77 = sphi 0, %s76
      %s91 = sphi 0, %s77
      %s95 = sphi 0, %s95
      %s97 = sphi 0, %s95
      %s98 = sphi 0, %s97
      %s112 = sphi 0, %s98
      %s116 = sphi 0, %s116
      %s118 = sphi 0, %s116
      %s119 = sphi 0, %s118
      %s133 = sphi 0, %s119
      %s139 = sphi 0, %s141
      %s142 = sphi 0, %s139
      %s143 = sphi 0, %s142
      %s159 = sphi 0, %s143
    $region4: #{network_forward.1} parent=1 // loop_header_branch
      %22 = sbr.rel (%p20) target = $region8
    $region5: #{network_forward.1} parent=1 // loop_body
      %s24 = ssub.s32 %s19, 1
      %s25 = ssub.s32 %s19, 2
      %s26 = sadd.s32 %s19, 1
      %s27 = ssub.s32 %s19, %s26
      %p28 = scmp.eq.s32.totalorder %s27, 0
      %s30 = sadd.s32 %s29, 1
      %s31 = scalar_select %p28, %s29, %s30
      %p34 = pneg %p28
      %p35 = scmp.eq.s32.totalorder %s19, 1
      %p36 = por %p34, %p35
      %p37 = scmp.ne.s32.totalorder %s29, %s32
      %p38 = scmp.eq.s32.totalorder %s19, 0
      %p39 = por %p37, %p38
      %p40 = scmp.ne.s32.totalorder %s29, %s32
      %p41 = scmp.eq.s32.totalorder %s24, 1
      %p42 = por %p40, %p41
      %p43 = scmp.ne.s32.totalorder %s32, %s33
      %p44 = scmp.eq.s32.totalorder %s24, 0
      %p45 = por %p43, %p44
      %p46 = scmp.ne.s32.totalorder %s32, %s33
      %p47 = scmp.eq.s32.totalorder %s25, 1
      %p48 = por %p46, %p47
      %p50 = scmp.ne.s32.totalorder %s33, %s49
      %p51 = scmp.eq.s32.totalorder %s25, 0
      %p52 = por %p50, %p51
      %s54 = sadd.s32 %s53, 1
      %p57 = scmp.eq.s32.totalorder %s19, 1
      %p58 = scmp.ne.s32.totalorder %s53, %s55
      %p59 = scmp.eq.s32.totalorder %s19, 0
      %p60 = por %p58, %p59
      %p61 = scmp.ne.s32.totalorder %s53, %s55
      %p62 = scmp.eq.s32.totalorder %s24, 1
      %p63 = por %p61, %p62
      %p64 = scmp.ne.s32.totalorder %s55, %s56
      %p65 = scmp.eq.s32.totalorder %s24, 0
      %p66 = por %p64, %p65
      %p67 = scmp.ne.s32.totalorder %s55, %s56
      %p68 = scmp.eq.s32.totalorder %s25, 1
      %p69 = por %p67, %p68
      %p71 = scmp.ne.s32.totalorder %s56, %s70
      %p72 = scmp.eq.s32.totalorder %s25, 0
      %p73 = por %p71, %p72
      %s75 = sadd.s32 %s74, 1
      %p78 = scmp.eq.s32.totalorder %s19, 1
      %p79 = scmp.ne.s32.totalorder %s74, %s76
      %p80 = scmp.eq.s32.totalorder %s19, 0
      %p81 = por %p79, %p80
      %p82 = scmp.ne.s32.totalorder %s74, %s76
      %p83 = scmp.eq.s32.totalorder %s24, 1
      %p84 = por %p82, %p83
      %p85 = scmp.ne.s32.totalorder %s76, %s77
      %p86 = scmp.eq.s32.totalorder %s24, 0
      %p87 = por %p85, %p86
      %p88 = scmp.ne.s32.totalorder %s76, %s77
      %p89 = scmp.eq.s32.totalorder %s25, 1
      %p90 = por %p88, %p89
      %p92 = scmp.ne.s32.totalorder %s77, %s91
      %p93 = scmp.eq.s32.totalorder %s25, 0
      %p94 = por %p92, %p93
      %s96 = sadd.s32 %s95, 1
      %p99 = scmp.eq.s32.totalorder %s19, 1
      %p100 = scmp.ne.s32.totalorder %s95, %s97
      %p101 = scmp.eq.s32.totalorder %s19, 0
      %p102 = por %p100, %p101
      %p103 = scmp.ne.s32.totalorder %s95, %s97
      %p104 = scmp.eq.s32.totalorder %s24, 1
      %p105 = por %p103, %p104
      %p106 = scmp.ne.s32.totalorder %s97, %s98
      %p107 = scmp.eq.s32.totalorder %s24, 0
      %p108 = por %p106, %p107
      %p109 = scmp.ne.s32.totalorder %s97, %s98
      %p110 = scmp.eq.s32.totalorder %s25, 1
      %p111 = por %p109, %p110
      %p113 = scmp.ne.s32.totalorder %s98, %s112
      %p114 = scmp.eq.s32.totalorder %s25, 0
      %p115 = por %p113, %p114
      %s117 = sadd.s32 %s116, 1
      %p120 = scmp.eq.s32.totalorder %s19, 1
      %p121 = scmp.ne.s32.totalorder %s116, %s118
      %p122 = scmp.eq.s32.totalorder %s19, 0
      %p123 = por %p121, %p122
      %p124 = scmp.ne.s32.totalorder %s116, %s118
      %p125 = scmp.eq.s32.totalorder %s24, 1
      %p126 = por %p124, %p125
      %p127 = scmp.ne.s32.totalorder %s118, %s119
      %p128 = scmp.eq.s32.totalorder %s24, 0
      %p129 = por %p127, %p128
      %p130 = scmp.ne.s32.totalorder %s118, %s119
      %p131 = scmp.eq.s32.totalorder %s25, 1
      %p132 = por %p130, %p131
      %p134 = scmp.ne.s32.totalorder %s119, %s133
      %p135 = scmp.eq.s32.totalorder %s25, 0
      %p136 = por %p134, %p135
      %s137 = ssub.s32 %s19, %s26
      %p138 = scmp.eq.s32.totalorder %s137, 0
      %s140 = sadd.s32 %s139, 1
      %s141 = scalar_select %p138, %s139, %s140
      %p144 = pneg %p138
      %p145 = scmp.eq.s32.totalorder %s19, 1
      %p146 = por %p144, %p145
      %p147 = scmp.ne.s32.totalorder %s139, %s142
      %p148 = scmp.eq.s32.totalorder %s19, 0
      %p149 = por %p147, %p148
      %p150 = scmp.ne.s32.totalorder %s139, %s142
      %p151 = scmp.eq.s32.totalorder %s24, 1
      %p152 = por %p150, %p151
      %p153 = scmp.ne.s32.totalorder %s142, %s143
      %p154 = scmp.eq.s32.totalorder %s24, 0
      %p155 = por %p153, %p154
      %p156 = scmp.ne.s32.totalorder %s142, %s143
      %p157 = scmp.eq.s32.totalorder %s25, 1
      %p158 = por %p156, %p157
      %p160 = scmp.ne.s32.totalorder %s143, %s159
      %p161 = scmp.eq.s32.totalorder %s25, 0
      %p162 = por %p160, %p161
      %p163 = scmp.le.s32.totalorder 1, %s19
      %p164 = scmp.lt.s32.totalorder %s19, 3
      %p165 = pnand %p163, %p164
      %p166 = pneg %p165
      // Predicated region
      $region9: #{network_forward.1} parent=5 // pred_check
        _
      $region10: #{network_forward.1} parent=5 // pred_check_branch
        %168 = sbr.rel (%p165) target = $region12
      $region11: #{network_forward.1} parent=5 // pred_region
        %s169 = ssub.s32 %s19, 1
        // Predicated region
        $region13: #{network_forward.1} parent=11 // pred_check
          %p170 = pneg %p66
        $region14: #{network_forward.1} parent=11 // pred_check_branch
          %172 = sbr.rel (%p170) target = $region16
        $region15: #{network_forward.1} parent=11 // pred_region
          %s174 = ssub.s32 1024, 1024
          %175 = vsyncadd [#allocation6], %s174
          %s176 = sshll.u32 [#allocation5], 4
          %s177 = int_to_ptr.vmem [resolvable:$true] %s176
          %182 = dma.hbm_to_vmem [thread:$0]  %s1, 1024, %s177, [#allocation6], 64, 64, 4
        $region16: #{network_forward.1} parent=11 // pred_fallthru
          _
        // Predicated region
        $region17: #{network_forward.1} parent=11 // pred_check
          %p183 = pneg %p87
        $region18: #{network_forward.1} parent=11 // pred_check_branch
          %185 = sbr.rel (%p183) target = $region20
        $region19: #{network_forward.1} parent=11 // pred_region
          %s187 = ssub.s32 16, 16
          %188 = vsyncadd [#allocation6], %s187
          %s190 = sshll.u32 [#allocation7], 4
          %s191 = int_to_ptr.vmem [resolvable:$true] %s190
          %193 = dma.hbm_to_vmem [thread:$0]  %s2, 16, %s191, [#allocation6]
        $region20: #{network_forward.1} parent=11 // pred_fallthru
          _
        // Predicated region
        $region21: #{network_forward.1} parent=11 // pred_check
          %p194 = pneg %p108
        $region22: #{network_forward.1} parent=11 // pred_check_branch
          %196 = sbr.rel (%p194) target = $region24
        $region23: #{network_forward.1} parent=11 // pred_region
          %s198 = ssub.s32 1024, 1024
          %199 = vsyncadd [#allocation9], %s198
          %s200 = sshll.u32 [#allocation8], 4
          %s201 = int_to_ptr.vmem [resolvable:$true] %s200
          %206 = dma.hbm_to_vmem [thread:$0]  %s3, 1024, %s201, [#allocation9], 64, 64, 4
        $region24: #{network_forward.1} parent=11 // pred_fallthru
          _
        // Predicated region
        $region25: #{network_forward.1} parent=11 // pred_check
          %p207 = pneg %p129
        $region26: #{network_forward.1} parent=11 // pred_check_branch
          %209 = sbr.rel (%p207) target = $region28
        $region27: #{network_forward.1} parent=11 // pred_region
          %s211 = ssub.s32 16, 16
          %212 = vsyncadd [#allocation9], %s211
          %s214 = sshll.u32 [#allocation10], 4
          %s215 = int_to_ptr.vmem [resolvable:$true] %s214
          %217 = dma.hbm_to_vmem [thread:$0]  %s4, 16, %s215, [#allocation9]
        $region28: #{network_forward.1} parent=11 // pred_fallthru
          _
      $region12: #{network_forward.1} parent=5 // pred_fallthru
        _
      %p218 = scmp.lt.s32.totalorder %s19, 2
      // Predicated region
      $region29: #{network_forward.1} parent=5 // pred_check
        %p219 = pneg %p218
      $region30: #{network_forward.1} parent=5 // pred_check_branch
        %221 = sbr.rel (%p219) target = $region32
      $region31: #{network_forward.1} parent=5 // pred_region
        // Predicated region
        $region33: #{network_forward.1} parent=31 // pred_check
          %p222 = pneg %p39
        $region34: #{network_forward.1} parent=31 // pred_check_branch
          %224 = sbr.rel (%p222) target = $region36
        $region35: #{network_forward.1} parent=31 // pred_region
          %s225 = sand.u32 %s29, 1
          %s226 = scalar_lea.sflag [#allocation3], %s225
          %s227 = sand.u32 %s29, 1
          %s228 = smul.addr %s227, 128
          %s229 = scalar_lea.vmem [#allocation2], %s228
          %s231 = ssub.s32 2048, 2048
          %232 = vsyncadd %s226, %s231
          %s233 = smul.addr %s19, 32
          %s234 = smul.addr %s233, 64
          %s235 = scalar_lea.hbm %s0, %s234
          %s236 = sshll.u32 %s229, 4
          %s237 = int_to_ptr.vmem [resolvable:$true] %s236
          %242 = dma.hbm_to_vmem [thread:$0]  %s235, 2048, %s237, %s226, 64, 64, 4
        $region36: #{network_forward.1} parent=31 // pred_fallthru
          _
      $region32: #{network_forward.1} parent=5 // pred_fallthru
        _
      %p243 = scmp.le.s32.totalorder 1, %s19
      %p244 = scmp.lt.s32.totalorder %s19, 3
      %p245 = pnand %p243, %p244
      %p246 = pneg %p245
      // Predicated region
      $region37: #{network_forward.1} parent=5 // pred_check
        _
      $region38: #{network_forward.1} parent=5 // pred_check_branch
        %248 = sbr.rel (%p245) target = $region40
      $region39: #{network_forward.1} parent=5 // pred_region
        %s249 = ssub.s32 %s19, 1
        %s250 = sand.u32 %s32, 1
        %s251 = scalar_lea.sflag [#allocation3], %s250
        %s252 = sand.u32 %s32, 1
        %s253 = smul.addr %s252, 128
        %s254 = scalar_lea.vmem [#allocation2], %s253
        // Predicated region
        $region41: #{network_forward.1} parent=39 // pred_check
          %p255 = pneg %p45
        $region42: #{network_forward.1} parent=39 // pred_check_branch
          %257 = sbr.rel (%p255) target = $region44
        $region43: #{network_forward.1} parent=39 // pred_region
          %258 = dma.done %s251, 2048
        $region44: #{network_forward.1} parent=39 // pred_fallthru
          _
        // Predicated region
        $region45: #{network_forward.1} parent=39 // pred_check
          %p259 = pneg %p66
        $region46: #{network_forward.1} parent=39 // pred_check_branch
          %261 = sbr.rel (%p259) target = $region48
        $region47: #{network_forward.1} parent=39 // pred_region
          %262 = dma.done [#allocation6], 1024
        $region48: #{network_forward.1} parent=39 // pred_fallthru
          _
        // Predicated region
        $region49: #{network_forward.1} parent=39 // pred_check
          %p263 = pneg %p87
        $region50: #{network_forward.1} parent=39 // pred_check_branch
          %265 = sbr.rel (%p263) target = $region52
        $region51: #{network_forward.1} parent=39 // pred_region
          %266 = dma.done [#allocation6], 16
        $region52: #{network_forward.1} parent=39 // pred_fallthru
          _
        // Predicated region
        $region53: #{network_forward.1} parent=39 // pred_check
          %p267 = pneg %p108
        $region54: #{network_forward.1} parent=39 // pred_check_branch
          %269 = sbr.rel (%p267) target = $region56
        $region55: #{network_forward.1} parent=39 // pred_region
          %270 = dma.done [#allocation9], 1024
        $region56: #{network_forward.1} parent=39 // pred_fallthru
          _
        // Predicated region
        $region57: #{network_forward.1} parent=39 // pred_check
          %p271 = pneg %p129
        $region58: #{network_forward.1} parent=39 // pred_check_branch
          %273 = sbr.rel (%p271) target = $region60
        $region59: #{network_forward.1} parent=39 // pred_region
          %274 = dma.done [#allocation9], 16
        $region60: #{network_forward.1} parent=39 // pred_fallthru
          _
        %s275 = sand.u32 %s32, 1
        %s276 = scalar_lea.sflag [#allocation3], %s275
        %s277 = sand.u32 %s32, 1
        %s278 = smul.addr %s277, 128
        %s279 = scalar_lea.vmem [#allocation2], %s278
        %p280 = pneg %p45
        %p281 = pneg %p42
        %p282 = pneg %p66
        %p283 = pneg %p63
        %p284 = pneg %p87
        %p285 = pneg %p84
        %p286 = pneg %p108
        %p287 = pneg %p105
        %p288 = pneg %p129
        %p289 = pneg %p126
        %p290 = pneg %p155
        %p291 = pneg %p152
        %s292 = sand.u32 %s142, 1
        %s293 = scalar_lea.sflag [#allocation4], %s292
        %s294 = sand.u32 %s142, 1
        %s295 = scalar_lea.vmem [#allocation11], %s294
        %v297 = vld [vmem:[%s254] sm:$0xf]
        %v298 = vld [vmem:[%s254 + $0x4] sm:$0xf]
        %v299 = vld [vmem:[%s254 + $0x8] sm:$0xf]
        %v300 = vld [vmem:[%s254 + $0xc] sm:$0xf]
        %v301 = vld [vmem:[%s254 + $0x10] sm:$0xf]
        %v302 = vld [vmem:[%s254 + $0x14] sm:$0xf]
        %v303 = vld [vmem:[%s254 + $0x18] sm:$0xf]
        %v304 = vld [vmem:[%s254 + $0x1c] sm:$0xf]
        %v305 = vld [vmem:[%s254 + $0x20] sm:$0xf]
        %v306 = vld [vmem:[%s254 + $0x24] sm:$0xf]
        %v307 = vld [vmem:[%s254 + $0x28] sm:$0xf]
        %v308 = vld [vmem:[%s254 + $0x2c] sm:$0xf]
        %v309 = vld [vmem:[%s254 + $0x30] sm:$0xf]
        %v310 = vld [vmem:[%s254 + $0x34] sm:$0xf]
        %v311 = vld [vmem:[%s254 + $0x38] sm:$0xf]
        %v312 = vld [vmem:[%s254 + $0x3c] sm:$0xf]
        %v313 = vld [vmem:[%s254 + $0x40] sm:$0xf]
        %v314 = vld [vmem:[%s254 + $0x44] sm:$0xf]
        %v315 = vld [vmem:[%s254 + $0x48] sm:$0xf]
        %v316 = vld [vmem:[%s254 + $0x4c] sm:$0xf]
        %v317 = vld [vmem:[%s254 + $0x50] sm:$0xf]
        %v318 = vld [vmem:[%s254 + $0x54] sm:$0xf]
        %v319 = vld [vmem:[%s254 + $0x58] sm:$0xf]
        %v320 = vld [vmem:[%s254 + $0x5c] sm:$0xf]
        %v321 = vld [vmem:[%s254 + $0x60] sm:$0xf]
        %v322 = vld [vmem:[%s254 + $0x64] sm:$0xf]
        %v323 = vld [vmem:[%s254 + $0x68] sm:$0xf]
        %v324 = vld [vmem:[%s254 + $0x6c] sm:$0xf]
        %v325 = vld [vmem:[%s254 + $0x70] sm:$0xf]
        %v326 = vld [vmem:[%s254 + $0x74] sm:$0xf]
        %v327 = vld [vmem:[%s254 + $0x78] sm:$0xf]
        %v328 = vld [vmem:[%s254 + $0x7c] sm:$0xf]
        %v329 = vld [vmem:[#allocation5] sm:$0xf]
        %v330 = vld [vmem:[#allocation5 + $0x4] sm:$0xf]
        %v331 = vld [vmem:[#allocation5 + $0x8] sm:$0xf]
        %v332 = vld [vmem:[#allocation5 + $0xc] sm:$0xf]
        %v333 = vld [vmem:[#allocation5 + $0x10] sm:$0xf]
        %v334 = vld [vmem:[#allocation5 + $0x14] sm:$0xf]
        %v335 = vld [vmem:[#allocation5 + $0x18] sm:$0xf]
        %v336 = vld [vmem:[#allocation5 + $0x1c] sm:$0xf]
        %v337 = vld [vmem:[#allocation5 + $0x20] sm:$0xf]
        %v338 = vld [vmem:[#allocation5 + $0x24] sm:$0xf]
        %v339 = vld [vmem:[#allocation5 + $0x28] sm:$0xf]
        %v340 = vld [vmem:[#allocation5 + $0x2c] sm:$0xf]
        %v341 = vld [vmem:[#allocation5 + $0x30] sm:$0xf]
        %v342 = vld [vmem:[#allocation5 + $0x34] sm:$0xf]
        %v343 = vld [vmem:[#allocation5 + $0x38] sm:$0xf]
        %v344 = vld [vmem:[#allocation5 + $0x3c] sm:$0xf]
        %v345 = vld [vmem:[#allocation7] sm:$0x1]
        %v347 = vlaneseq
        %v348 = vshrl.u32 %v347, 7
        %v349 = vsub.s32 0, %v348
        %v350 = vrot.slane %v345, %v349
        %v384 = vunpack.c.l.b16 %v297
        %v385 = vunpack.c.l.b16 %v298
        %v386 = vunpack.c.l.b16 %v299
        %v387 = vunpack.c.l.b16 %v300
        %v388 = vunpack.c.l.b16 %v301
        %v389 = vunpack.c.l.b16 %v302
        %v390 = vunpack.c.l.b16 %v303
        %v391 = vunpack.c.l.b16 %v304
        %v392 = vunpack.c.l.b16 %v305
        %v393 = vunpack.c.l.b16 %v306
        %v394 = vunpack.c.l.b16 %v307
        %v395 = vunpack.c.l.b16 %v308
        %v396 = vunpack.c.l.b16 %v309
        %v397 = vunpack.c.l.b16 %v310
        %v398 = vunpack.c.l.b16 %v311
        %v399 = vunpack.c.l.b16 %v312
        %v400 = vunpack.c.l.b16 %v313
        %v401 = vunpack.c.l.b16 %v314
        %v402 = vunpack.c.l.b16 %v315
        %v403 = vunpack.c.l.b16 %v316
        %v404 = vunpack.c.l.b16 %v317
        %v405 = vunpack.c.l.b16 %v318
        %v406 = vunpack.c.l.b16 %v319
        %v407 = vunpack.c.l.b16 %v320
        %v408 = vunpack.c.l.b16 %v321
        %v409 = vunpack.c.l.b16 %v322
        %v410 = vunpack.c.l.b16 %v323
        %v411 = vunpack.c.l.b16 %v324
        %v412 = vunpack.c.l.b16 %v325
        %v413 = vunpack.c.l.b16 %v326
        %v414 = vunpack.c.l.b16 %v327
        %v415 = vunpack.c.l.b16 %v328
        %v416 = vpack.c.b16 %v385, %v384
        %v417 = vpack.c.b16 %v387, %v386
        %v418 = vpack.c.b16 %v389, %v388
        %v419 = vpack.c.b16 %v391, %v390
        %v420 = vpack.c.b16 %v393, %v392
        %v421 = vpack.c.b16 %v395, %v394
        %v422 = vpack.c.b16 %v397, %v396
        %v423 = vpack.c.b16 %v399, %v398
        %v424 = vpack.c.b16 %v401, %v400
        %v425 = vpack.c.b16 %v403, %v402
        %v426 = vpack.c.b16 %v405, %v404
        %v427 = vpack.c.b16 %v407, %v406
        %v428 = vpack.c.b16 %v409, %v408
        %v429 = vpack.c.b16 %v411, %v410
        %v430 = vpack.c.b16 %v413, %v412
        %v431 = vpack.c.b16 %v415, %v414
        %v464 = vunpack.c.l.b16 %v329
        %v465 = vunpack.c.l.b16 %v330
        %v466 = vunpack.c.l.b16 %v331
        %v467 = vunpack.c.l.b16 %v332
        %v468 = vunpack.c.l.b16 %v333
        %v469 = vunpack.c.l.b16 %v334
        %v470 = vunpack.c.l.b16 %v335
        %v471 = vunpack.c.l.b16 %v336
        %v472 = vunpack.c.l.b16 %v337
        %v473 = vunpack.c.l.b16 %v338
        %v474 = vunpack.c.l.b16 %v339
        %v475 = vunpack.c.l.b16 %v340
        %v476 = vunpack.c.l.b16 %v341
        %v477 = vunpack.c.l.b16 %v342
        %v478 = vunpack.c.l.b16 %v343
        %v479 = vunpack.c.l.b16 %v344
        %v480 = vpack.c.b16 %v465, %v464
        %v481 = vpack.c.b16 %v467, %v466
        %v482 = vpack.c.b16 %v469, %v468
        %v483 = vpack.c.b16 %v471, %v470
        %v484 = vpack.c.b16 %v473, %v472
        %v485 = vpack.c.b16 %v475, %v474
        %v486 = vpack.c.b16 %v477, %v476
        %v487 = vpack.c.b16 %v479, %v478
        %496 = vmatprep.subr.bf16.mxu0 0
        %497 = vmatpush1.bf16.msra.mxu0 %v480
        %498 = vmatprep.subr.bf16.mxu0 0
        %499 = vmatpush1.bf16.msra.mxu0 %v481
        %500 = vmatprep.subr.bf16.mxu0 0
        %501 = vmatpush1.bf16.msra.mxu0 %v482
        %502 = vmatprep.subr.bf16.mxu0 0
        %503 = vmatpush1.bf16.msra.mxu0 %v483
        %504 = vmatprep.subr.bf16.mxu0 0
        %505 = vmatpush1.bf16.msra.mxu0 %v484
        %506 = vmatprep.subr.bf16.mxu0 0
        %507 = vmatpush1.bf16.msra.mxu0 %v485
        %508 = vmatprep.subr.bf16.mxu0 0
        %509 = vmatpush1.bf16.msra.mxu0 %v486
        %510 = vmatprep.subr.bf16.mxu0 0
        %511 = vmatpush1.bf16.msra.mxu0 %v487
        %512 = vmatprep.subr.bf16.mxu0 0
        %513 = vmatpush1.bf16.msra.mxu0 0
        %514 = vmatprep.subr.bf16.mxu0 0
        %515 = vmatpush1.bf16.msra.mxu0 0
        %516 = vmatprep.subr.bf16.mxu0 0
        %517 = vmatpush1.bf16.msra.mxu0 0
        %518 = vmatprep.subr.bf16.mxu0 0
        %519 = vmatpush1.bf16.msra.mxu0 0
        %520 = vmatprep.subr.bf16.mxu0 0
        %521 = vmatpush1.bf16.msra.mxu0 0
        %522 = vmatprep.subr.bf16.mxu0 0
        %523 = vmatpush1.bf16.msra.mxu0 0
        %524 = vmatprep.subr.bf16.mxu0 0
        %525 = vmatpush1.bf16.msra.mxu0 0
        %526 = vmatprep.subr.bf16.mxu0 0
        %527 = vmatpush1.bf16.msra.mxu0 0
        %528 = vmatprep.mubr.bf16.mxu0 0
        %529 = vmatmul.mubr.bf16.gmra.mrb[0].mxu0 %v416
        %v530 = vpop.f32.mrb[0].mxu0
        %v531 = vadd.f32 %v350, %v530
        %v532 = vpop.f32.mrb[0].mxu0
        %v533 = vpop.f32.mrb[0].mxu0
        %v534 = vadd.f32 %v350, %v533
        %v535 = vpop.f32.mrb[0].mxu0
        %536 = vmatprep.mubr.bf16.mxu0 0
        %537 = vmatmul.mubr.bf16.gmra.mrb[0].mxu0 %v417
        %v538 = vpop.f32.mrb[0].mxu0
        %v539 = vadd.f32 %v350, %v538
        %v540 = vpop.f32.mrb[0].mxu0
        %v541 = vpop.f32.mrb[0].mxu0
        %v542 = vadd.f32 %v350, %v541
        %v543 = vpop.f32.mrb[0].mxu0
        %544 = vmatprep.mubr.bf16.mxu0 0
        %545 = vmatmul.mubr.bf16.gmra.mrb[0].mxu0 %v418
        %v546 = vpop.f32.mrb[0].mxu0
        %v547 = vadd.f32 %v350, %v546
        %v548 = vpop.f32.mrb[0].mxu0
        %v549 = vpop.f32.mrb[0].mxu0
        %v550 = vadd.f32 %v350, %v549
        %v551 = vpop.f32.mrb[0].mxu0
        %552 = vmatprep.mubr.bf16.mxu0 0
        %553 = vmatmul.mubr.bf16.gmra.mrb[0].mxu0 %v419
        %v554 = vpop.f32.mrb[0].mxu0
        %v555 = vadd.f32 %v350, %v554
        %v556 = vpop.f32.mrb[0].mxu0
        %v557 = vpop.f32.mrb[0].mxu0
        %v558 = vadd.f32 %v350, %v557
        %v559 = vpop.f32.mrb[0].mxu0
        %560 = vmatprep.mubr.bf16.mxu0 0
        %561 = vmatmul.mubr.bf16.gmra.mrb[0].mxu0 %v420
        %v562 = vpop.f32.mrb[0].mxu0
        %v563 = vadd.f32 %v350, %v562
        %v564 = vpop.f32.mrb[0].mxu0
        %v565 = vpop.f32.mrb[0].mxu0
        %v566 = vadd.f32 %v350, %v565
        %v567 = vpop.f32.mrb[0].mxu0
        %568 = vmatprep.mubr.bf16.mxu0 0
        %569 = vmatmul.mubr.bf16.gmra.mrb[0].mxu0 %v421
        %v570 = vpop.f32.mrb[0].mxu0
        %v571 = vadd.f32 %v350, %v570
        %v572 = vpop.f32.mrb[0].mxu0
        %v573 = vpop.f32.mrb[0].mxu0
        %v574 = vadd.f32 %v350, %v573
        %v575 = vpop.f32.mrb[0].mxu0
        %576 = vmatprep.mubr.bf16.mxu0 0
        %577 = vmatmul.mubr.bf16.gmra.mrb[0].mxu0 %v422
        %v578 = vpop.f32.mrb[0].mxu0
        %v579 = vadd.f32 %v350, %v578
        %v580 = vpop.f32.mrb[0].mxu0
        %v581 = vpop.f32.mrb[0].mxu0
        %v582 = vadd.f32 %v350, %v581
        %v583 = vpop.f32.mrb[0].mxu0
        %584 = vmatprep.mubr.bf16.mxu0 0
        %585 = vmatmul.mubr.bf16.gmra.mrb[0].mxu0 %v423
        %v586 = vpop.f32.mrb[0].mxu0
        %v587 = vadd.f32 %v350, %v586
        %v588 = vpop.f32.mrb[0].mxu0
        %v589 = vpop.f32.mrb[0].mxu0
        %v590 = vadd.f32 %v350, %v589
        %v591 = vpop.f32.mrb[0].mxu0
        %592 = vmatprep.mubr.bf16.mxu0 0
        %593 = vmatmul.mubr.bf16.gmra.mrb[0].mxu0 %v424
        %v594 = vpop.f32.mrb[0].mxu0
        %v595 = vadd.f32 %v350, %v594
        %v596 = vpop.f32.mrb[0].mxu0
        %v597 = vpop.f32.mrb[0].mxu0
        %v598 = vadd.f32 %v350, %v597
        %v599 = vpop.f32.mrb[0].mxu0
        %600 = vmatprep.mubr.bf16.mxu0 0
        %601 = vmatmul.mubr.bf16.gmra.mrb[0].mxu0 %v425
        %v602 = vpop.f32.mrb[0].mxu0
        %v603 = vadd.f32 %v350, %v602
        %v604 = vpop.f32.mrb[0].mxu0
        %v605 = vpop.f32.mrb[0].mxu0
        %v606 = vadd.f32 %v350, %v605
        %v607 = vpop.f32.mrb[0].mxu0
        %608 = vmatprep.mubr.bf16.mxu0 0
        %609 = vmatmul.mubr.bf16.gmra.mrb[0].mxu0 %v426
        %v610 = vpop.f32.mrb[0].mxu0
        %v611 = vadd.f32 %v350, %v610
        %v612 = vpop.f32.mrb[0].mxu0
        %v613 = vpop.f32.mrb[0].mxu0
        %v614 = vadd.f32 %v350, %v613
        %v615 = vpop.f32.mrb[0].mxu0
        %616 = vmatprep.mubr.bf16.mxu0 0
        %617 = vmatmul.mubr.bf16.gmra.mrb[0].mxu0 %v427
        %v618 = vpop.f32.mrb[0].mxu0
        %v619 = vadd.f32 %v350, %v618
        %v620 = vpop.f32.mrb[0].mxu0
        %v621 = vpop.f32.mrb[0].mxu0
        %v622 = vadd.f32 %v350, %v621
        %v623 = vpop.f32.mrb[0].mxu0
        %624 = vmatprep.mubr.bf16.mxu0 0
        %625 = vmatmul.mubr.bf16.gmra.mrb[0].mxu0 %v428
        %v626 = vpop.f32.mrb[0].mxu0
        %v627 = vadd.f32 %v350, %v626
        %v628 = vpop.f32.mrb[0].mxu0
        %v629 = vpop.f32.mrb[0].mxu0
        %v630 = vadd.f32 %v350, %v629
        %v631 = vpop.f32.mrb[0].mxu0
        %632 = vmatprep.mubr.bf16.mxu0 0
        %633 = vmatmul.mubr.bf16.gmra.mrb[0].mxu0 %v429
        %v634 = vpop.f32.mrb[0].mxu0
        %v635 = vadd.f32 %v350, %v634
        %v636 = vpop.f32.mrb[0].mxu0
        %v637 = vpop.f32.mrb[0].mxu0
        %v638 = vadd.f32 %v350, %v637
        %v639 = vpop.f32.mrb[0].mxu0
        %640 = vmatprep.mubr.bf16.mxu0 0
        %641 = vmatmul.mubr.bf16.gmra.mrb[0].mxu0 %v430
        %v642 = vpop.f32.mrb[0].mxu0
        %v643 = vadd.f32 %v350, %v642
        %v644 = vpop.f32.mrb[0].mxu0
        %v645 = vpop.f32.mrb[0].mxu0
        %v646 = vadd.f32 %v350, %v645
        %v647 = vpop.f32.mrb[0].mxu0
        %648 = vmatprep.mubr.bf16.mxu0 0
        %649 = vmatmul.mubr.bf16.gmra.mrb[0].mxu0 %v431
        %v650 = vpop.f32.mrb[0].mxu0
        %v651 = vadd.f32 %v350, %v650
        %v652 = vpop.f32.mrb[0].mxu0
        %v653 = vpop.f32.mrb[0].mxu0
        %v654 = vadd.f32 %v350, %v653
        %v655 = vpop.f32.mrb[0].mxu0
        %656 = vdwg.mxu0
        %v657 = vmax.f32 %v531, 0.0
        %v658 = vmax.f32 %v534, 0.0
        %v659 = vmax.f32 %v539, 0.0
        %v660 = vmax.f32 %v542, 0.0
        %v661 = vmax.f32 %v547, 0.0
        %v662 = vmax.f32 %v550, 0.0
        %v663 = vmax.f32 %v555, 0.0
        %v664 = vmax.f32 %v558, 0.0
        %v665 = vmax.f32 %v563, 0.0
        %v666 = vmax.f32 %v566, 0.0
        %v667 = vmax.f32 %v571, 0.0
        %v668 = vmax.f32 %v574, 0.0
        %v669 = vmax.f32 %v579, 0.0
        %v670 = vmax.f32 %v582, 0.0
        %v671 = vmax.f32 %v587, 0.0
        %v672 = vmax.f32 %v590, 0.0
        %v673 = vmax.f32 %v595, 0.0
        %v674 = vmax.f32 %v598, 0.0
        %v675 = vmax.f32 %v603, 0.0
        %v676 = vmax.f32 %v606, 0.0
        %v677 = vmax.f32 %v611, 0.0
        %v678 = vmax.f32 %v614, 0.0
        %v679 = vmax.f32 %v619, 0.0
        %v680 = vmax.f32 %v622, 0.0
        %v681 = vmax.f32 %v627, 0.0
        %v682 = vmax.f32 %v630, 0.0
        %v683 = vmax.f32 %v635, 0.0
        %v684 = vmax.f32 %v638, 0.0
        %v685 = vmax.f32 %v643, 0.0
        %v686 = vmax.f32 %v646, 0.0
        %v687 = vmax.f32 %v651, 0.0
        %v688 = vmax.f32 %v654, 0.0
        %v689 = vadd.f32 %v657, %v658
        %v690 = vadd.f32 %v689, %v659
        %v691 = vadd.f32 %v690, %v660
        %v692 = vadd.f32 %v691, %v661
        %v693 = vadd.f32 %v692, %v662
        %v694 = vadd.f32 %v693, %v663
        %v695 = vadd.f32 %v694, %v664
        %v696 = vadd.f32 %v695, %v665
        %v697 = vadd.f32 %v696, %v666
        %v698 = vadd.f32 %v697, %v667
        %v699 = vadd.f32 %v698, %v668
        %v700 = vadd.f32 %v699, %v669
        %v701 = vadd.f32 %v700, %v670
        %v702 = vadd.f32 %v701, %v671
        %v703 = vadd.f32 %v702, %v672
        %v704 = vadd.f32 %v703, %v673
        %v705 = vadd.f32 %v704, %v674
        %v706 = vadd.f32 %v705, %v675
        %v707 = vadd.f32 %v706, %v676
        %v708 = vadd.f32 %v707, %v677
        %v709 = vadd.f32 %v708, %v678
        %v710 = vadd.f32 %v709, %v679
        %v711 = vadd.f32 %v710, %v680
        %v712 = vadd.f32 %v711, %v681
        %v713 = vadd.f32 %v712, %v682
        %v714 = vadd.f32 %v713, %v683
        %v715 = vadd.f32 %v714, %v684
        %v716 = vadd.f32 %v715, %v685
        %v717 = vadd.f32 %v716, %v686
        %v718 = vadd.f32 %v717, %v687
        %v719 = vadd.f32 %v718, %v688
        %v720 = vrot.slane %v719, 4
        %v721 = vadd.f32 %v719, %v720
        %v722 = vrot.slane %v721, 2
        %v723 = vadd.f32 %v721, %v722
        %v724 = vrot.slane %v723, 1
        %v725 = vadd.f32 %v723, %v724
        %v726 = vmul.f32 %v725, 0.00390625
        %v727 = vpack.c.bf16 %v726, %v726
        %v728 = vld [vmem:[#allocation8] sm:$0xf]
        %v729 = vld [vmem:[#allocation8 + $0x4] sm:$0xf]
        %v730 = vld [vmem:[#allocation8 + $0x8] sm:$0xf]
        %v731 = vld [vmem:[#allocation8 + $0xc] sm:$0xf]
        %v732 = vld [vmem:[#allocation8 + $0x10] sm:$0xf]
        %v733 = vld [vmem:[#allocation8 + $0x14] sm:$0xf]
        %v734 = vld [vmem:[#allocation8 + $0x18] sm:$0xf]
        %v735 = vld [vmem:[#allocation8 + $0x1c] sm:$0xf]
        %v736 = vld [vmem:[#allocation8 + $0x20] sm:$0xf]
        %v737 = vld [vmem:[#allocation8 + $0x24] sm:$0xf]
        %v738 = vld [vmem:[#allocation8 + $0x28] sm:$0xf]
        %v739 = vld [vmem:[#allocation8 + $0x2c] sm:$0xf]
        %v740 = vld [vmem:[#allocation8 + $0x30] sm:$0xf]
        %v741 = vld [vmem:[#allocation8 + $0x34] sm:$0xf]
        %v742 = vld [vmem:[#allocation8 + $0x38] sm:$0xf]
        %v743 = vld [vmem:[#allocation8 + $0x3c] sm:$0xf]
        %v744 = vld [vmem:[#allocation10] sm:$0x1]
        %v761 = vunpack.c.l.b16 %v728
        %v762 = vunpack.c.l.b16 %v729
        %v763 = vunpack.c.l.b16 %v730
        %v764 = vunpack.c.l.b16 %v731
        %v765 = vunpack.c.l.b16 %v732
        %v766 = vunpack.c.l.b16 %v733
        %v767 = vunpack.c.l.b16 %v734
        %v768 = vunpack.c.l.b16 %v735
        %v769 = vunpack.c.l.b16 %v736
        %v770 = vunpack.c.l.b16 %v737
        %v771 = vunpack.c.l.b16 %v738
        %v772 = vunpack.c.l.b16 %v739
        %v773 = vunpack.c.l.b16 %v740
        %v774 = vunpack.c.l.b16 %v741
        %v775 = vunpack.c.l.b16 %v742
        %v776 = vunpack.c.l.b16 %v743
        %v777 = vpack.c.b16 %v762, %v761
        %v778 = vpack.c.b16 %v764, %v763
        %v779 = vpack.c.b16 %v766, %v765
        %v780 = vpack.c.b16 %v768, %v767
        %v781 = vpack.c.b16 %v770, %v769
        %v782 = vpack.c.b16 %v772, %v771
        %v783 = vpack.c.b16 %v774, %v773
        %v784 = vpack.c.b16 %v776, %v775
        %793 = vmatprep.subr.bf16.mxu0 0
        %794 = vmatpush1.bf16.msra.mxu0 %v777
        %795 = vmatprep.subr.bf16.mxu0 0
        %796 = vmatpush1.bf16.msra.mxu0 %v778
        %797 = vmatprep.subr.bf16.mxu0 0
        %798 = vmatpush1.bf16.msra.mxu0 %v779
        %799 = vmatprep.subr.bf16.mxu0 0
        %800 = vmatpush1.bf16.msra.mxu0 %v780
        %801 = vmatprep.subr.bf16.mxu0 0
        %802 = vmatpush1.bf16.msra.mxu0 %v781
        %803 = vmatprep.subr.bf16.mxu0 0
        %804 = vmatpush1.bf16.msra.mxu0 %v782
        %805 = vmatprep.subr.bf16.mxu0 0
        %806 = vmatpush1.bf16.msra.mxu0 %v783
        %807 = vmatprep.subr.bf16.mxu0 0
        %808 = vmatpush1.bf16.msra.mxu0 %v784
        %809 = vmatprep.subr.bf16.mxu0 0
        %810 = vmatpush1.bf16.msra.mxu0 0
        %811 = vmatprep.subr.bf16.mxu0 0
        %812 = vmatpush1.bf16.msra.mxu0 0
        %813 = vmatprep.subr.bf16.mxu0 0
        %814 = vmatpush1.bf16.msra.mxu0 0
        %815 = vmatprep.subr.bf16.mxu0 0
        %816 = vmatpush1.bf16.msra.mxu0 0
        %817 = vmatprep.subr.bf16.mxu0 0
        %818 = vmatpush1.bf16.msra.mxu0 0
        %819 = vmatprep.subr.bf16.mxu0 0
        %820 = vmatpush1.bf16.msra.mxu0 0
        %821 = vmatprep.subr.bf16.mxu0 0
        %822 = vmatpush1.bf16.msra.mxu0 0
        %823 = vmatprep.subr.bf16.mxu0 0
        %824 = vmatpush1.bf16.msra.mxu0 0
        %825 = vmatprep.mubr.bf16.mxu0 0
        %826 = vmatmul.mubr.bf16.gmra.mrb[0].mxu0 %v727
        %v827 = vpop.f32.mrb[0].mxu0
        %v828 = vadd.f32 %v744, %v827
        %v829 = vpop.f32.mrb[0].mxu0
        %v830 = vpop.f32.mrb[0].mxu0
        %v831 = vpop.f32.mrb[0].mxu0
        %832 = vdwg.mxu0
        %833 = vst [vmem:[%s295] sm:$0x1] %v828
        %s834 = sand.u32 %s142, 1
        %s835 = scalar_lea.sflag [#allocation4], %s834
        %s836 = sand.u32 %s142, 1
        %s837 = scalar_lea.vmem [#allocation11], %s836
        // Predicated region
        $region61: #{network_forward.1} parent=39 // pred_check
          %p838 = pneg %p152
        $region62: #{network_forward.1} parent=39 // pred_check_branch
          %840 = sbr.rel (%p838) target = $region64
        $region63: #{network_forward.1} parent=39 // pred_region
          %s842 = ssub.s32 16, 16
          %843 = vsyncadd %s835, %s842
          %s844 = smul.addr %s24, 16
          %s845 = scalar_lea.hbm %s5, %s844
          %s847 = sshll.u32 %s837, 4
          %s848 = int_to_ptr.vmem [resolvable:$true] %s847
          %850 = dma.vmem_to_hbm [thread:$0]  %s848, 16, %s845, %s835
        $region64: #{network_forward.1} parent=39 // pred_fallthru
          _
      $region40: #{network_forward.1} parent=5 // pred_fallthru
        _
      %p851 = scmp.le.s32.totalorder 2, %s19
      // Predicated region
      $region65: #{network_forward.1} parent=5 // pred_check
        %p852 = pneg %p851
      $region66: #{network_forward.1} parent=5 // pred_check_branch
        %854 = sbr.rel (%p852) target = $region68
      $region67: #{network_forward.1} parent=5 // pred_region
        %s855 = ssub.s32 %s19, 2
        // Predicated region
        $region69: #{network_forward.1} parent=67 // pred_check
          %p856 = pneg %p158
        $region70: #{network_forward.1} parent=67 // pred_check_branch
          %858 = sbr.rel (%p856) target = $region72
        $region71: #{network_forward.1} parent=67 // pred_region
          %s859 = sand.u32 %s143, 1
          %s860 = scalar_lea.sflag [#allocation4], %s859
          %s861 = sand.u32 %s143, 1
          %s862 = scalar_lea.vmem [#allocation11], %s861
          %863 = dma.done %s860, 16
        $region72: #{network_forward.1} parent=67 // pred_fallthru
          _
      $region68: #{network_forward.1} parent=5 // pred_fallthru
        _
    $region6: #{network_forward.1} parent=1 // loop_footer
      %s23 = sadd.s32 1, %s19
    $region7: #{network_forward.1} parent=1 // loop_footer_branch
      %18 = sbr.rel target = $region3
    $region8: #{network_forward.1} parent=1 // loop_exit
      _
    %864 = vsyncpa [#allocation3], 1
    %s865 = scalar_lea.sflag [#allocation3], 1
    %866 = vsyncpa %s865, 1
    %867 = vsyncpa [#allocation6], 1
    %868 = vsyncpa [#allocation9], 1
    %869 = vsyncpa [#allocation4], 1
    %s870 = scalar_lea.sflag [#allocation4], 1
    %871 = vsyncpa %s870, 1

</llo_original>
